<compile_context>
chip_gen: v7x
topology: tpu7x:2x2x1
jax: 0.10.0
libtpu: 0.0.40
codegen_flags: <defaults>
</compile_context>

<pallas_src>
import functools

import jax
import jax.numpy as jnp
from jax.experimental import pallas as pl
from jax.experimental.pallas import tpu as pltpu


def _conv3x3_relu_kernel(x_ref, w_ref, b_ref, o_ref, *, wp, ol):
    # x_ref: (C_in, IB)        bf16  -- one image, zero-padded, spatially flattened
    # w_ref: (9, C_out, C_in)  bf16  -- per-tap weight matrices
    # b_ref: (C_out, 1)        f32
    # o_ref: (C_out, OL)       f32   -- OL multiple of 128 => lane-dense stores
    acc = jnp.zeros(o_ref.shape, jnp.float32)
    for t in range(9):                                # 3x3 taps, fully unrolled
        off = (t // 3) * wp + (t % 3)                 # static lane offset
        xs = x_ref[:, off:off + ol]                   # (C_in, OL) shifted window
        acc += jnp.dot(w_ref[t], xs,                  # (C_out, OL) MXU dot
                       preferred_element_type=jnp.float32)
    acc = acc + b_ref[...]                            # f32 VPU epilogue
    o_ref[...] = jnp.maximum(acc, 0.0)                # fused ReLU


def dist_module_forward(x_nchw, weight_oihw, bias):
    """Forward of DistModule(Conv2d(C_in->C_out, 3x3, pad=1) + ReLU). NCHW in/out."""
    B, C_in, H, W = x_nchw.shape
    C_out, _, KH, KW = weight_oihw.shape
    assert (KH, KW) == (3, 3)

    wp = W + 2                                        # padded row width
    valid = (H - 1) * wp + W                          # flattened length of valid outputs
    ol = ((valid + 127) // 128) * 128                 # round output slab up to lane-dense
    # enough padded rows so every shifted read (max offset 2*wp+2) stays in-bounds
    hp = max(H + 2, -(-(2 * wp + 2 + ol) // wp))
    ib = hp * wp

    # Pad + flatten spatial dims; bf16 feed for the MXU (f32 accumulation in-kernel).
    x_pad = jnp.pad(x_nchw, ((0, 0), (0, 0), (1, hp - H - 1), (1, 1)))
    x_flat = x_pad.reshape(B, C_in, ib).astype(jnp.bfloat16)

    # torch weight (C_out, C_in, KH, KW) -> per-tap (9, C_out, C_in), bf16
    w_taps = jnp.transpose(weight_oihw, (2, 3, 0, 1)).reshape(KH * KW, C_out, C_in)
    w_taps = w_taps.astype(jnp.bfloat16)
    b_col = bias.astype(jnp.float32).reshape(C_out, 1)

    kernel = functools.partial(_conv3x3_relu_kernel, wp=wp, ol=ol)

    cost = pl.CostEstimate(
        flops=2 * B * ol * KH * KW * C_in * C_out,
        transcendentals=0,
        bytes_accessed=(x_flat.size * 2 + w_taps.size * 2 + b_col.size * 4
                        + B * C_out * ol * 4),
    )

    out = pl.pallas_call(
        kernel,
        out_shape=jax.ShapeDtypeStruct((B, C_out, ol), jnp.float32),
        grid_spec=pltpu.PrefetchScalarGridSpec(
            num_scalar_prefetch=0,
            grid=(B,),                                 # >= 2 steps -> both v7x TCs busy
            in_specs=[
                pl.BlockSpec((None, C_in, ib), lambda b: (b, 0, 0)),       # one image
                pl.BlockSpec((KH * KW, C_out, C_in), lambda b: (0, 0, 0)),  # all taps
                pl.BlockSpec((C_out, 1), lambda b: (0, 0)),                 # bias
            ],
            out_specs=pl.BlockSpec((None, C_out, ol), lambda b: (b, 0, 0)),
        ),
        compiler_params=pltpu.CompilerParams(
            dimension_semantics=("parallel",)),
        cost_estimate=cost,
    )(x_flat, w_taps, b_col)

    # (B, C_out, OL) -> NCHW: keep valid flattened positions, drop pad columns.
    out = out[:, :, :H * wp].reshape(B, C_out, H, wp)[:, :, :, :W]
    return out


if __name__ == "__main__":
    key = jax.random.PRNGKey(0)
    kx, kw, kb = jax.random.split(key, 3)

    B, C_in, H, W = 2, 4, 16, 16
    C_out = 8

    x = jax.random.normal(kx, (B, C_in, H, W), dtype=jnp.float32)
    # Deterministic parameter init (stands in for the rank-0 broadcast state).
    weight = jax.random.normal(kw, (C_out, C_in, 3, 3), dtype=jnp.float32) * 0.1
    bias = jax.random.normal(kb, (C_out,), dtype=jnp.float32) * 0.1

    y = dist_module_forward(x, weight, bias)
    y = jax.block_until_ready(y)

    # Reference: f32 conv (torch Conv2d+ReLU semantics) on the same bf16-rounded
    # activations/weights that the kernel feeds to the MXU.
    x_r = x.astype(jnp.bfloat16).astype(jnp.float32)
    w_r = weight.astype(jnp.bfloat16).astype(jnp.float32)
    y_ref = jax.lax.conv_general_dilated(
        x_r, w_r, window_strides=(1, 1), padding="SAME",
        dimension_numbers=("NCHW", "OIHW", "NCHW"),
        precision=jax.lax.Precision.HIGHEST)
    y_ref = jnp.maximum(y_ref + bias[None, :, None, None], 0.0)
    assert jnp.allclose(y, y_ref, atol=1e-3, rtol=1e-3), \
        float(jnp.max(jnp.abs(y - y_ref)))

    print("KERNEL_OK")
</pallas_src>

<mosaic_0001>
module attributes {stable_mosaic.version = 11 : i64} {
  func.func @_conv3x3_relu_kernel(%arg0: i32, %arg1: memref<1x4x432xbf16, #tpu.memory_space<vmem>>, %arg2: memref<9x8x4xbf16, #tpu.memory_space<vmem>>, %arg3: memref<8x1xf32, #tpu.memory_space<vmem>>, %arg4: memref<1x8x384xf32, #tpu.memory_space<vmem>>) attributes {dimension_semantics = [#tpu.dimension_semantics<parallel>], iteration_bounds = array<i64: 2>, scalar_prefetch = 0 : i64, scratch_operands = 0 : i64, tpu.core_type = #tpu.core_type<tc>, window_params = [{transform_indices = @transform_0, window_bounds = array<i64: 1, 4, 432>}, {pipeline_mode = #tpu.pipeline_mode<synchronous>, transform_indices = @transform_1, window_bounds = array<i64: 9, 8, 4>}, {pipeline_mode = #tpu.pipeline_mode<synchronous>, transform_indices = @transform_2, window_bounds = array<i64: 8, 1>}, {transform_indices = @transform_3, window_bounds = array<i64: 1, 8, 384>}]} {
    %cst = arith.constant 0.000000e+00 : f32
    %0 = vector.broadcast %cst : f32 to vector<8x384xf32>
    %c0 = arith.constant 0 : index
    %c0_0 = arith.constant 0 : index
    %c0_1 = arith.constant 0 : index
    %1 = vector.load %arg1[%c0, %c0_0, %c0_1] : memref<1x4x432xbf16, #tpu.memory_space<vmem>>, vector<1x4x384xbf16>
    %2 = vector.shape_cast %1 : vector<1x4x384xbf16> to vector<4x384xbf16>
    %c0_2 = arith.constant 0 : index
    %c0_3 = arith.constant 0 : index
    %c0_4 = arith.constant 0 : index
    %3 = vector.load %arg2[%c0_2, %c0_3, %c0_4] : memref<9x8x4xbf16, #tpu.memory_space<vmem>>, vector<1x8x4xbf16>
    %4 = vector.shape_cast %3 : vector<1x8x4xbf16> to vector<8x4xbf16>
    %cst_5 = arith.constant dense<0.000000e+00> : vector<8x384xf32>
    %5 = tpu.matmul %4, %2, %cst_5 {dimension_numbers = #tpu.dot_dimension_numbers<[1], [0], [0], [1], [0, 0, 1, 1], [], []>} : vector<8x4xbf16>, vector<4x384xbf16>, vector<8x384xf32> -> vector<8x384xf32>
    %6 = arith.addf %0, %5 : vector<8x384xf32>
    %c0_6 = arith.constant 0 : index
    %c0_7 = arith.constant 0 : index
    %c1 = arith.constant 1 : index
    %7 = vector.load %arg1[%c0_6, %c0_7, %c1] : memref<1x4x432xbf16, #tpu.memory_space<vmem>>, vector<1x4x384xbf16>
    %8 = vector.shape_cast %7 : vector<1x4x384xbf16> to vector<4x384xbf16>
    %c1_8 = arith.constant 1 : index
    %c0_9 = arith.constant 0 : index
    %c0_10 = arith.constant 0 : index
    %9 = vector.load %arg2[%c1_8, %c0_9, %c0_10] : memref<9x8x4xbf16, #tpu.memory_space<vmem>>, vector<1x8x4xbf16>
    %10 = vector.shape_cast %9 : vector<1x8x4xbf16> to vector<8x4xbf16>
    %cst_11 = arith.constant dense<0.000000e+00> : vector<8x384xf32>
    %11 = tpu.matmul %10, %8, %cst_11 {dimension_numbers = #tpu.dot_dimension_numbers<[1], [0], [0], [1], [0, 0, 1, 1], [], []>} : vector<8x4xbf16>, vector<4x384xbf16>, vector<8x384xf32> -> vector<8x384xf32>
    %12 = arith.addf %6, %11 : vector<8x384xf32>
    %c0_12 = arith.constant 0 : index
    %c0_13 = arith.constant 0 : index
    %c2 = arith.constant 2 : index
    %13 = vector.load %arg1[%c0_12, %c0_13, %c2] : memref<1x4x432xbf16, #tpu.memory_space<vmem>>, vector<1x4x384xbf16>
    %14 = vector.shape_cast %13 : vector<1x4x384xbf16> to vector<4x384xbf16>
    %c2_14 = arith.constant 2 : index
    %c0_15 = arith.constant 0 : index
    %c0_16 = arith.constant 0 : index
    %15 = vector.load %arg2[%c2_14, %c0_15, %c0_16] : memref<9x8x4xbf16, #tpu.memory_space<vmem>>, vector<1x8x4xbf16>
    %16 = vector.shape_cast %15 : vector<1x8x4xbf16> to vector<8x4xbf16>
    %cst_17 = arith.constant dense<0.000000e+00> : vector<8x384xf32>
    %17 = tpu.matmul %16, %14, %cst_17 {dimension_numbers = #tpu.dot_dimension_numbers<[1], [0], [0], [1], [0, 0, 1, 1], [], []>} : vector<8x4xbf16>, vector<4x384xbf16>, vector<8x384xf32> -> vector<8x384xf32>
    %18 = arith.addf %12, %17 : vector<8x384xf32>
    %c0_18 = arith.constant 0 : index
    %c0_19 = arith.constant 0 : index
    %c18 = arith.constant 18 : index
    %19 = vector.load %arg1[%c0_18, %c0_19, %c18] : memref<1x4x432xbf16, #tpu.memory_space<vmem>>, vector<1x4x384xbf16>
    %20 = vector.shape_cast %19 : vector<1x4x384xbf16> to vector<4x384xbf16>
    %c3 = arith.constant 3 : index
    %c0_20 = arith.constant 0 : index
    %c0_21 = arith.constant 0 : index
    %21 = vector.load %arg2[%c3, %c0_20, %c0_21] : memref<9x8x4xbf16, #tpu.memory_space<vmem>>, vector<1x8x4xbf16>
    %22 = vector.shape_cast %21 : vector<1x8x4xbf16> to vector<8x4xbf16>
    %cst_22 = arith.constant dense<0.000000e+00> : vector<8x384xf32>
    %23 = tpu.matmul %22, %20, %cst_22 {dimension_numbers = #tpu.dot_dimension_numbers<[1], [0], [0], [1], [0, 0, 1, 1], [], []>} : vector<8x4xbf16>, vector<4x384xbf16>, vector<8x384xf32> -> vector<8x384xf32>
    %24 = arith.addf %18, %23 : vector<8x384xf32>
    %c0_23 = arith.constant 0 : index
    %c0_24 = arith.constant 0 : index
    %c19 = arith.constant 19 : index
    %25 = vector.load %arg1[%c0_23, %c0_24, %c19] : memref<1x4x432xbf16, #tpu.memory_space<vmem>>, vector<1x4x384xbf16>
    %26 = vector.shape_cast %25 : vector<1x4x384xbf16> to vector<4x384xbf16>
    %c4 = arith.constant 4 : index
    %c0_25 = arith.constant 0 : index
    %c0_26 = arith.constant 0 : index
    %27 = vector.load %arg2[%c4, %c0_25, %c0_26] : memref<9x8x4xbf16, #tpu.memory_space<vmem>>, vector<1x8x4xbf16>
    %28 = vector.shape_cast %27 : vector<1x8x4xbf16> to vector<8x4xbf16>
    %cst_27 = arith.constant dense<0.000000e+00> : vector<8x384xf32>
    %29 = tpu.matmul %28, %26, %cst_27 {dimension_numbers = #tpu.dot_dimension_numbers<[1], [0], [0], [1], [0, 0, 1, 1], [], []>} : vector<8x4xbf16>, vector<4x384xbf16>, vector<8x384xf32> -> vector<8x384xf32>
    %30 = arith.addf %24, %29 : vector<8x384xf32>
    %c0_28 = arith.constant 0 : index
    %c0_29 = arith.constant 0 : index
    %c20 = arith.constant 20 : index
    %31 = vector.load %arg1[%c0_28, %c0_29, %c20] : memref<1x4x432xbf16, #tpu.memory_space<vmem>>, vector<1x4x384xbf16>
    %32 = vector.shape_cast %31 : vector<1x4x384xbf16> to vector<4x384xbf16>
    %c5 = arith.constant 5 : index
    %c0_30 = arith.constant 0 : index
    %c0_31 = arith.constant 0 : index
    %33 = vector.load %arg2[%c5, %c0_30, %c0_31] : memref<9x8x4xbf16, #tpu.memory_space<vmem>>, vector<1x8x4xbf16>
    %34 = vector.shape_cast %33 : vector<1x8x4xbf16> to vector<8x4xbf16>
    %cst_32 = arith.constant dense<0.000000e+00> : vector<8x384xf32>
    %35 = tpu.matmul %34, %32, %cst_32 {dimension_numbers = #tpu.dot_dimension_numbers<[1], [0], [0], [1], [0, 0, 1, 1], [], []>} : vector<8x4xbf16>, vector<4x384xbf16>, vector<8x384xf32> -> vector<8x384xf32>
    %36 = arith.addf %30, %35 : vector<8x384xf32>
    %c0_33 = arith.constant 0 : index
    %c0_34 = arith.constant 0 : index
    %c36 = arith.constant 36 : index
    %37 = vector.load %arg1[%c0_33, %c0_34, %c36] : memref<1x4x432xbf16, #tpu.memory_space<vmem>>, vector<1x4x384xbf16>
    %38 = vector.shape_cast %37 : vector<1x4x384xbf16> to vector<4x384xbf16>
    %c6 = arith.constant 6 : index
    %c0_35 = arith.constant 0 : index
    %c0_36 = arith.constant 0 : index
    %39 = vector.load %arg2[%c6, %c0_35, %c0_36] : memref<9x8x4xbf16, #tpu.memory_space<vmem>>, vector<1x8x4xbf16>
    %40 = vector.shape_cast %39 : vector<1x8x4xbf16> to vector<8x4xbf16>
    %cst_37 = arith.constant dense<0.000000e+00> : vector<8x384xf32>
    %41 = tpu.matmul %40, %38, %cst_37 {dimension_numbers = #tpu.dot_dimension_numbers<[1], [0], [0], [1], [0, 0, 1, 1], [], []>} : vector<8x4xbf16>, vector<4x384xbf16>, vector<8x384xf32> -> vector<8x384xf32>
    %42 = arith.addf %36, %41 : vector<8x384xf32>
    %c0_38 = arith.constant 0 : index
    %c0_39 = arith.constant 0 : index
    %c37 = arith.constant 37 : index
    %43 = vector.load %arg1[%c0_38, %c0_39, %c37] : memref<1x4x432xbf16, #tpu.memory_space<vmem>>, vector<1x4x384xbf16>
    %44 = vector.shape_cast %43 : vector<1x4x384xbf16> to vector<4x384xbf16>
    %c7 = arith.constant 7 : index
    %c0_40 = arith.constant 0 : index
    %c0_41 = arith.constant 0 : index
    %45 = vector.load %arg2[%c7, %c0_40, %c0_41] : memref<9x8x4xbf16, #tpu.memory_space<vmem>>, vector<1x8x4xbf16>
    %46 = vector.shape_cast %45 : vector<1x8x4xbf16> to vector<8x4xbf16>
    %cst_42 = arith.constant dense<0.000000e+00> : vector<8x384xf32>
    %47 = tpu.matmul %46, %44, %cst_42 {dimension_numbers = #tpu.dot_dimension_numbers<[1], [0], [0], [1], [0, 0, 1, 1], [], []>} : vector<8x4xbf16>, vector<4x384xbf16>, vector<8x384xf32> -> vector<8x384xf32>
    %48 = arith.addf %42, %47 : vector<8x384xf32>
    %c0_43 = arith.constant 0 : index
    %c0_44 = arith.constant 0 : index
    %c38 = arith.constant 38 : index
    %49 = vector.load %arg1[%c0_43, %c0_44, %c38] : memref<1x4x432xbf16, #tpu.memory_space<vmem>>, vector<1x4x384xbf16>
    %50 = vector.shape_cast %49 : vector<1x4x384xbf16> to vector<4x384xbf16>
    %c8 = arith.constant 8 : index
    %c0_45 = arith.constant 0 : index
    %c0_46 = arith.constant 0 : index
    %51 = vector.load %arg2[%c8, %c0_45, %c0_46] : memref<9x8x4xbf16, #tpu.memory_space<vmem>>, vector<1x8x4xbf16>
    %52 = vector.shape_cast %51 : vector<1x8x4xbf16> to vector<8x4xbf16>
    %cst_47 = arith.constant dense<0.000000e+00> : vector<8x384xf32>
    %53 = tpu.matmul %52, %50, %cst_47 {dimension_numbers = #tpu.dot_dimension_numbers<[1], [0], [0], [1], [0, 0, 1, 1], [], []>} : vector<8x4xbf16>, vector<4x384xbf16>, vector<8x384xf32> -> vector<8x384xf32>
    %54 = arith.addf %48, %53 : vector<8x384xf32>
    %c0_48 = arith.constant 0 : index
    %c0_49 = arith.constant 0 : index
    %55 = vector.load %arg3[%c0_48, %c0_49] : memref<8x1xf32, #tpu.memory_space<vmem>>, vector<8x1xf32>
    %56 = vector.broadcast %55 : vector<8x1xf32> to vector<8x384xf32>
    %57 = arith.addf %54, %56 : vector<8x384xf32>
    %cst_50 = arith.constant 0.000000e+00 : f32
    %58 = vector.broadcast %cst_50 : f32 to vector<8x384xf32>
    %59 = arith.maximumf %57, %58 : vector<8x384xf32>
    %c0_51 = arith.constant 0 : index
    %c0_52 = arith.constant 0 : index
    %c0_53 = arith.constant 0 : index
    %60 = vector.load %arg4[%c0_51, %c0_52, %c0_53] : memref<1x8x384xf32, #tpu.memory_space<vmem>>, vector<1x8x384xf32>
    %61 = vector.shape_cast %60 : vector<1x8x384xf32> to vector<8x384xf32>
    %62 = vector.shape_cast %59 : vector<8x384xf32> to vector<1x8x384xf32>
    tpu.vector_store %arg4[%c0_51, %c0_52, %c0_53], %62 {strides = array<i32>} : memref<1x8x384xf32, #tpu.memory_space<vmem>>, vector<1x8x384xf32>,
    return
  }
  func.func @transform_0(%arg0: i32) -> (i32, i32, i32) {
    %c0_i32 = arith.constant 0 : i32
    %c0_i32_0 = arith.constant 0 : i32
    %c0_i32_1 = arith.constant 0 : i32
    return %arg0, %c0_i32, %c0_i32_0 : i32, i32, i32
  }
  func.func @transform_1(%arg0: i32) -> (i32, i32, i32) {
    %c0_i32 = arith.constant 0 : i32
    %c0_i32_0 = arith.constant 0 : i32
    %c0_i32_1 = arith.constant 0 : i32
    %c0_i32_2 = arith.constant 0 : i32
    return %c0_i32, %c0_i32_0, %c0_i32_1 : i32, i32, i32
  }
  func.func @transform_2(%arg0: i32) -> (i32, i32) {
    %c0_i32 = arith.constant 0 : i32
    %c0_i32_0 = arith.constant 0 : i32
    %c0_i32_1 = arith.constant 0 : i32
    return %c0_i32, %c0_i32_0 : i32, i32
  }
  func.func @transform_3(%arg0: i32) -> (i32, i32, i32) {
    %c0_i32 = arith.constant 0 : i32
    %c0_i32_0 = arith.constant 0 : i32
    %c0_i32_1 = arith.constant 0 : i32
    return %arg0, %c0_i32, %c0_i32_0 : i32, i32, i32
  }
}

</mosaic_0001>

<llo_original>
// kernel: tpu_custom_call.1
$region0: #{tpu_custom_call.1}
  #allocation0 [shape = 'u32[]', space=smem, size = 0x4, offset = 0x4, fixed_abs, tag = 'smem constant byte address 0x4 - core index']
  #allocation1 [shape = 'u32[144,128]{1,0:T(1,128)}', space=vmem, size = 0x12000, scoped, tag = 'internal scratch']
  %s0 = inlined_call_operand.vmem [shape: bf16[2,4,432], index: 0, kind: input, shape index: {}]
  %s1 = inlined_call_operand.vmem [shape: bf16[9,8,4], index: 1, kind: input, shape index: {}]
  %s2 = inlined_call_operand.vmem [shape: f32[8,1], index: 2, kind: input, shape index: {}]
  %s3 = inlined_call_operand.hbm [shape: f32[2,8,384], index: 3, kind: output, shape index: {}]
  %s4 = sld [smem:[#allocation0]]
  $region45: #{tpu_custom_call.1} parent=0
    _
  %s6 = ssub.s32 1, %s4
  %s7 = scalar_select 0, %s6, %s4
  $region1: #{tpu_custom_call.1} parent=0
    #allocation2 [shape = 'u8[24576]{0}', space=vmem, size = 0x6000, scoped, tag = 'output window, operand 0']
    #allocation3 [shape = 's32[2]{0}', space=sflag, size = 0x8, scoped, tag = 'scoped memory for tpu_custom_call.1']
    %8 = vsyncpa [#allocation3], 0
    %s9 = scalar_lea.sflag [#allocation3], 1
    %10 = vsyncpa %s9, 0
    loop: start=0, step=1, limit=4
    $region2: #{tpu_custom_call.1} parent=1 // loop_pre_header
      _
    $region3: #{tpu_custom_call.1} parent=1 // loop_header
      %s12 = sphi 0, %s16
      %p13 = scmp.ge.s32.totalorder %s12, 4
      %s22 = sphi 0, %s24
      %s25 = sphi 0, %s22
      %s26 = sphi 0, %s25
      %s42 = sphi 0, %s26
      %s46 = sphi 0, %s46
      %s48 = sphi 0, %s46
      %s49 = sphi 0, %s48
      %s63 = sphi 0, %s49
      %s67 = sphi 0, %s67
      %s69 = sphi 0, %s67
      %s70 = sphi 0, %s69
      %s84 = sphi 0, %s70
      %s90 = sphi 0, %s92
      %s93 = sphi 0, %s90
      %s94 = sphi 0, %s93
      %s110 = sphi 0, %s94
    $region4: #{tpu_custom_call.1} parent=1 // loop_header_branch
      %15 = sbr.rel (%p13) target = $region8
    $region5: #{tpu_custom_call.1} parent=1 // loop_body
      %s17 = ssub.s32 %s12, 1
      %s18 = ssub.s32 %s12, 2
      %s19 = sadd.s32 %s12, 1
      %s20 = ssub.s32 %s12, %s19
      %p21 = scmp.eq.s32.totalorder %s20, 0
      %s23 = sadd.s32 %s22, 1
      %s24 = scalar_select %p21, %s22, %s23
      %p27 = pneg %p21
      %p28 = scmp.eq.s32.totalorder %s12, 1
      %p29 = por %p27, %p28
      %p30 = scmp.ne.s32.totalorder %s22, %s25
      %p31 = scmp.eq.s32.totalorder %s12, 0
      %p32 = por %p30, %p31
      %p33 = scmp.ne.s32.totalorder %s22, %s25
      %p34 = scmp.eq.s32.totalorder %s17, 1
      %p35 = por %p33, %p34
      %p36 = scmp.ne.s32.totalorder %s25, %s26
      %p37 = scmp.eq.s32.totalorder %s17, 0
      %p38 = por %p36, %p37
      %p39 = scmp.ne.s32.totalorder %s25, %s26
      %p40 = scmp.eq.s32.totalorder %s18, 1
      %p41 = por %p39, %p40
      %p43 = scmp.ne.s32.totalorder %s26, %s42
      %p44 = scmp.eq.s32.totalorder %s18, 0
      %p45 = por %p43, %p44
      %s47 = sadd.s32 %s46, 1
      %p50 = scmp.eq.s32.totalorder %s12, 1
      %p51 = scmp.ne.s32.totalorder %s46, %s48
      %p52 = scmp.eq.s32.totalorder %s12, 0
      %p53 = por %p51, %p52
      %p54 = scmp.ne.s32.totalorder %s46, %s48
      %p55 = scmp.eq.s32.totalorder %s17, 1
      %p56 = por %p54, %p55
      %p57 = scmp.ne.s32.totalorder %s48, %s49
      %p58 = scmp.eq.s32.totalorder %s17, 0
      %p59 = por %p57, %p58
      %p60 = scmp.ne.s32.totalorder %s48, %s49
      %p61 = scmp.eq.s32.totalorder %s18, 1
      %p62 = por %p60, %p61
      %p64 = scmp.ne.s32.totalorder %s49, %s63
      %p65 = scmp.eq.s32.totalorder %s18, 0
      %p66 = por %p64, %p65
      %s68 = sadd.s32 %s67, 1
      %p71 = scmp.eq.s32.totalorder %s12, 1
      %p72 = scmp.ne.s32.totalorder %s67, %s69
      %p73 = scmp.eq.s32.totalorder %s12, 0
      %p74 = por %p72, %p73
      %p75 = scmp.ne.s32.totalorder %s67, %s69
      %p76 = scmp.eq.s32.totalorder %s17, 1
      %p77 = por %p75, %p76
      %p78 = scmp.ne.s32.totalorder %s69, %s70
      %p79 = scmp.eq.s32.totalorder %s17, 0
      %p80 = por %p78, %p79
      %p81 = scmp.ne.s32.totalorder %s69, %s70
      %p82 = scmp.eq.s32.totalorder %s18, 1
      %p83 = por %p81, %p82
      %p85 = scmp.ne.s32.totalorder %s70, %s84
      %p86 = scmp.eq.s32.totalorder %s18, 0
      %p87 = por %p85, %p86
      %s88 = ssub.s32 %s12, %s19
      %p89 = scmp.eq.s32.totalorder %s88, 0
      %s91 = sadd.s32 %s90, 1
      %s92 = scalar_select %p89, %s90, %s91
      %p95 = pneg %p89
      %p96 = scmp.eq.s32.totalorder %s12, 1
      %p97 = por %p95, %p96
      %p98 = scmp.ne.s32.totalorder %s90, %s93
      %p99 = scmp.eq.s32.totalorder %s12, 0
      %p100 = por %p98, %p99
      %p101 = scmp.ne.s32.totalorder %s90, %s93
      %p102 = scmp.eq.s32.totalorder %s17, 1
      %p103 = por %p101, %p102
      %p104 = scmp.ne.s32.totalorder %s93, %s94
      %p105 = scmp.eq.s32.totalorder %s17, 0
      %p106 = por %p104, %p105
      %p107 = scmp.ne.s32.totalorder %s93, %s94
      %p108 = scmp.eq.s32.totalorder %s18, 1
      %p109 = por %p107, %p108
      %p111 = scmp.ne.s32.totalorder %s94, %s110
      %p112 = scmp.eq.s32.totalorder %s18, 0
      %p113 = por %p111, %p112
      %p114 = scmp.le.s32.totalorder 1, %s12
      %p115 = scmp.lt.s32.totalorder %s12, 3
      %p116 = pnand %p114, %p115
      %p117 = pneg %p116
      // Predicated region
      $region9: #{tpu_custom_call.1} parent=5 // pred_check
        _
      $region10: #{tpu_custom_call.1} parent=5 // pred_check_branch
        %119 = sbr.rel (%p116) target = $region12
      $region11: #{tpu_custom_call.1} parent=5 // pred_region
        %s120 = ssub.s32 %s12, 1
        // Predicated region
        $region13: #{tpu_custom_call.1} parent=11 // pred_check
          %p121 = pneg %p59
        $region14: #{tpu_custom_call.1} parent=11 // pred_check_branch
          %123 = sbr.rel (%p121) target = $region16
        $region15: #{tpu_custom_call.1} parent=11 // pred_region
          _
        $region16: #{tpu_custom_call.1} parent=11 // pred_fallthru
          _
        // Predicated region
        $region17: #{tpu_custom_call.1} parent=11 // pred_check
          %p124 = pneg %p80
        $region18: #{tpu_custom_call.1} parent=11 // pred_check_branch
          %126 = sbr.rel (%p124) target = $region20
        $region19: #{tpu_custom_call.1} parent=11 // pred_region
          _
        $region20: #{tpu_custom_call.1} parent=11 // pred_fallthru
          _
      $region12: #{tpu_custom_call.1} parent=5 // pred_fallthru
        _
      %p127 = scmp.lt.s32.totalorder %s12, 2
      // Predicated region
      $region21: #{tpu_custom_call.1} parent=5 // pred_check
        %p128 = pneg %p127
      $region22: #{tpu_custom_call.1} parent=5 // pred_check_branch
        %130 = sbr.rel (%p128) target = $region24
      $region23: #{tpu_custom_call.1} parent=5 // pred_region
        // Predicated region
        $region25: #{tpu_custom_call.1} parent=23 // pred_check
          %p131 = pneg %p32
        $region26: #{tpu_custom_call.1} parent=23 // pred_check_branch
          %133 = sbr.rel (%p131) target = $region28
        $region27: #{tpu_custom_call.1} parent=23 // pred_region
          %p134 = scmp.lt.s32.totalorder %s12, 1
          %s135 = scalar_select %p134, %s12, 1
          %s136 = smul.addr %s135, 4
          %s137 = smul.addr %s136, 2
          %s138 = scalar_lea.vmem %s0, %s137
        $region28: #{tpu_custom_call.1} parent=23 // pred_fallthru
          _
      $region24: #{tpu_custom_call.1} parent=5 // pred_fallthru
        _
      %p139 = scmp.le.s32.totalorder 1, %s12
      %p140 = scmp.lt.s32.totalorder %s12, 3
      %p141 = pnand %p139, %p140
      %p142 = pneg %p141
      // Predicated region
      $region29: #{tpu_custom_call.1} parent=5 // pred_check
        _
      $region30: #{tpu_custom_call.1} parent=5 // pred_check_branch
        %144 = sbr.rel (%p141) target = $region32
      $region31: #{tpu_custom_call.1} parent=5 // pred_region
        %s145 = ssub.s32 %s12, 1
        %p146 = scmp.lt.s32.totalorder %s17, 1
        %s147 = scalar_select %p146, %s17, 1
        %s148 = smul.addr %s147, 4
        %s149 = smul.addr %s148, 2
        %s150 = scalar_lea.vmem %s0, %s149
        %p151 = pneg %p38
        %p152 = pneg %p35
        %p153 = pneg %p59
        %p154 = pneg %p56
        %p155 = pneg %p80
        %p156 = pneg %p77
        %p157 = pneg %p106
        %p158 = pneg %p103
        %s159 = sand.u32 %s93, 1
        %s160 = scalar_lea.sflag [#allocation3], %s159
        %s161 = sand.u32 %s93, 1
        %s162 = smul.addr %s161, 24
        %s163 = scalar_lea.vmem [#allocation2], %s162
        %p164 = scmp.lt.s32.totalorder %s17, 1
        %s165 = scalar_select %p164, %s17, 1
        %s166 = smul.addr %s165, 4
        %s167 = smul.addr %s166, 2
        %s168 = scalar_lea.vmem %s0, %s167
        %v170 = vld [vmem:[%s168] sm:$0x3f]
        %v171 = vld [vmem:[%s1] sm:$0xf]
        %v172 = vld [vmem:[%s168] sm:$0xff]
        %s173 = scalar_lea.vmem %s1, 4
        %v174 = vld [vmem:[%s173] sm:$0xf]
        %v176 = vcombine.high %v172, %v172
        %v178 = vunpack.c.l.s4 1983009808
        %v179 = vunpack.c.0.s8 %v178
        %v180 = vlaneseq
        %v181 = vshrl.u32 %v180, 7
        %v182 = vsub.s32 %v179, %v181
        %v183 = vrot.slane %v172, %v182
        %v185 = vunpack.c.l.s4 1983009808
        %v186 = vunpack.c.0.s8 %v185
        %v187 = vlaneseq
        %v188 = vshrl.u32 %v187, 7
        %v189 = vsub.s32 %v186, %v188
        %v190 = vrot.slane %v176, %v189
        %v191 = vcombine.high %v183, %v183
        %v192 = vcombine.high %v190, %v190
        %193 = vrot.lane.b32.xlu0 %v183, 127
        %v194 = vpop.permute.xlu0 %193
        %195 = vrot.lane.b32.xlu0 %v191, 127
        %v196 = vpop.permute.xlu0 %195
        %197 = vrot.lane.b32.xlu0 %v190, 127
        %v198 = vpop.permute.xlu0 %197
        %199 = vrot.lane.b32.xlu0 %v192, 127
        %v200 = vpop.permute.xlu0 %199
        %vm201 = vcmask 1039360
        %v202 = vsel %vm201, %v194, %v196
        %v203 = vsel %vm201, %v196, %v198
        %v204 = vsel %vm201, %v198, %v200
        %vm205 = vcmask 31744
        %v207 = vsel %vm205, %v174, 0
        %vm209 = vcmask 1041408
        %v211 = vsel %vm209, %v202, 0
        %v214 = vsel %vm209, %v203, 0
        %v217 = vsel %vm209, %v204, 0
        %219 = vmatprep.subr.bf16.mxu0 %v214
        %220 = vmatpush1.bf16.msra.mxu0 %v211
        %221 = vmatprep.subr.bf16.mxu0 0
        %222 = vmatpush1.bf16.msra.mxu0 0
        %223 = vmatprep.subr.bf16.mxu0 0
        %224 = vmatpush1.bf16.msra.mxu0 0
        %225 = vmatprep.subr.bf16.mxu0 0
        %226 = vmatpush1.bf16.msra.mxu0 0
        %227 = vmatprep.subr.bf16.mxu0 0
        %228 = vmatpush1.bf16.msra.mxu0 0
        %229 = vmatprep.subr.bf16.mxu0 0
        %230 = vmatpush1.bf16.msra.mxu0 0
        %231 = vmatprep.subr.bf16.mxu0 0
        %232 = vmatpush1.bf16.msra.mxu0 0
        %233 = vmatprep.subr.bf16.mxu0 0
        %234 = vmatpush1.bf16.msra.mxu0 0
        %235 = vmatprep.subr.bf16.mxu0 0
        %236 = vmatpush1.bf16.msra.mxu0 0
        %237 = vmatprep.subr.bf16.mxu0 0
        %238 = vmatpush1.bf16.msra.mxu0 0
        %239 = vmatprep.subr.bf16.mxu0 0
        %240 = vmatpush1.bf16.msra.mxu0 0
        %241 = vmatprep.subr.bf16.mxu0 0
        %242 = vmatpush1.bf16.msra.mxu0 0
        %243 = vmatprep.subr.bf16.mxu0 0
        %244 = vmatpush1.bf16.msra.mxu0 0
        %245 = vmatprep.subr.bf16.mxu0 0
        %246 = vmatpush1.bf16.msra.mxu0 0
        %247 = vmatprep.subr.bf16.mxu0 0
        %248 = vmatpush1.bf16.msra.mxu0 0
        %249 = vmatprep.subr.bf16.mxu0 0
        %250 = vmatpush1.bf16.msra.mxu0 0
        %251 = vmatprep.mubr.bf16.mxu0 0
        %252 = vmatmul.mubr.bf16.gmra.mrb[0].mxu0 %v207
        %v253 = vpop.f32.mrb[0].mxu0
        %v254 = vadd.f32 0.0, %v253
        %v255 = vpop.f32.mrb[0].mxu0
        %v256 = vadd.f32 0.0, %v255
        %v257 = vpop.f32.mrb[0].mxu0
        %v258 = vpop.f32.mrb[0].mxu0
        %259 = vdwg.mxu0
        %260 = vmatprep.subr.bf16.mxu0 0
        %261 = vmatpush1.bf16.msra.mxu0 %v217
        %262 = vmatprep.subr.bf16.mxu0 0
        %263 = vmatpush1.bf16.msra.mxu0 0
        %264 = vmatprep.subr.bf16.mxu0 0
        %265 = vmatpush1.bf16.msra.mxu0 0
        %266 = vmatprep.subr.bf16.mxu0 0
        %267 = vmatpush1.bf16.msra.mxu0 0
        %268 = vmatprep.subr.bf16.mxu0 0
        %269 = vmatpush1.bf16.msra.mxu0 0
        %270 = vmatprep.subr.bf16.mxu0 0
        %271 = vmatpush1.bf16.msra.mxu0 0
        %272 = vmatprep.subr.bf16.mxu0 0
        %273 = vmatpush1.bf16.msra.mxu0 0
        %274 = vmatprep.subr.bf16.mxu0 0
        %275 = vmatpush1.bf16.msra.mxu0 0
        %276 = vmatprep.subr.bf16.mxu0 0
        %277 = vmatpush1.bf16.msra.mxu0 0
        %278 = vmatprep.subr.bf16.mxu0 0
        %279 = vmatpush1.bf16.msra.mxu0 0
        %280 = vmatprep.subr.bf16.mxu0 0
        %281 = vmatpush1.bf16.msra.mxu0 0
        %282 = vmatprep.subr.bf16.mxu0 0
        %283 = vmatpush1.bf16.msra.mxu0 0
        %284 = vmatprep.subr.bf16.mxu0 0
        %285 = vmatpush1.bf16.msra.mxu0 0
        %286 = vmatprep.subr.bf16.mxu0 0
        %287 = vmatpush1.bf16.msra.mxu0 0
        %288 = vmatprep.subr.bf16.mxu0 0
        %289 = vmatpush1.bf16.msra.mxu0 0
        %290 = vmatprep.subr.bf16.mxu0 0
        %291 = vmatpush1.bf16.msra.mxu0 0
        %292 = vmatprep.mubr.bf16.mxu0 0
        %293 = vmatmul.mubr.bf16.gmra.mrb[0].mxu0 %v207
        %v294 = vpop.f32.mrb[0].mxu0
        %v295 = vadd.f32 0.0, %v294
        %v296 = vpop.f32.mrb[0].mxu0
        %v297 = vpop.f32.mrb[0].mxu0
        %v298 = vpop.f32.mrb[0].mxu0
        %299 = vdwg.mxu0
        %v301 = vcombine.high %v170, %v170
        %v303 = vunpack.c.l.s4 1983009808
        %v304 = vunpack.c.0.s8 %v303
        %v305 = vlaneseq
        %v306 = vshrl.u32 %v305, 7
        %v307 = vsub.s32 %v304, %v306
        %v308 = vrot.slane %v170, %v307
        %v310 = vunpack.c.l.s4 1983009808
        %v311 = vunpack.c.0.s8 %v310
        %v312 = vlaneseq
        %v313 = vshrl.u32 %v312, 7
        %v314 = vsub.s32 %v311, %v313
        %v315 = vrot.slane %v301, %v314
        %v316 = vcombine.high %v308, %v308
        %v318 = vsel %vm205, %v171, 0
        %v321 = vsel %vm209, %v308, 0
        %v324 = vsel %vm209, %v316, 0
        %v327 = vsel %vm209, %v315, 0
        %329 = vmatprep.subr.bf16.mxu0 %v324
        %330 = vmatpush1.bf16.msra.mxu0 %v321
        %331 = vmatprep.subr.bf16.mxu0 0
        %332 = vmatpush1.bf16.msra.mxu0 0
        %333 = vmatprep.subr.bf16.mxu0 0
        %334 = vmatpush1.bf16.msra.mxu0 0
        %335 = vmatprep.subr.bf16.mxu0 0
        %336 = vmatpush1.bf16.msra.mxu0 0
        %337 = vmatprep.subr.bf16.mxu0 0
        %338 = vmatpush1.bf16.msra.mxu0 0
        %339 = vmatprep.subr.bf16.mxu0 0
        %340 = vmatpush1.bf16.msra.mxu0 0
        %341 = vmatprep.subr.bf16.mxu0 0
        %342 = vmatpush1.bf16.msra.mxu0 0
        %343 = vmatprep.subr.bf16.mxu0 0
        %344 = vmatpush1.bf16.msra.mxu0 0
        %345 = vmatprep.subr.bf16.mxu0 0
        %346 = vmatpush1.bf16.msra.mxu0 0
        %347 = vmatprep.subr.bf16.mxu0 0
        %348 = vmatpush1.bf16.msra.mxu0 0
        %349 = vmatprep.subr.bf16.mxu0 0
        %350 = vmatpush1.bf16.msra.mxu0 0
        %351 = vmatprep.subr.bf16.mxu0 0
        %352 = vmatpush1.bf16.msra.mxu0 0
        %353 = vmatprep.subr.bf16.mxu0 0
        %354 = vmatpush1.bf16.msra.mxu0 0
        %355 = vmatprep.subr.bf16.mxu0 0
        %356 = vmatpush1.bf16.msra.mxu0 0
        %357 = vmatprep.subr.bf16.mxu0 0
        %358 = vmatpush1.bf16.msra.mxu0 0
        %359 = vmatprep.subr.bf16.mxu0 0
        %360 = vmatpush1.bf16.msra.mxu0 0
        %361 = vmatprep.mubr.bf16.mxu0 0
        %362 = vmatmul.mubr.bf16.gmra.mrb[0].mxu0 %v318
        %v363 = vpop.f32.mrb[0].mxu0
        %v364 = vadd.f32 %v254, %v363
        %v365 = vpop.f32.mrb[0].mxu0
        %v366 = vadd.f32 %v256, %v365
        %v367 = vpop.f32.mrb[0].mxu0
        %v368 = vpop.f32.mrb[0].mxu0
        %369 = vdwg.mxu0
        %370 = vmatprep.subr.bf16.mxu0 0
        %371 = vmatpush1.bf16.msra.mxu0 %v327
        %372 = vmatprep.subr.bf16.mxu0 0
        %373 = vmatpush1.bf16.msra.mxu0 0
        %374 = vmatprep.subr.bf16.mxu0 0
        %375 = vmatpush1.bf16.msra.mxu0 0
        %376 = vmatprep.subr.bf16.mxu0 0
        %377 = vmatpush1.bf16.msra.mxu0 0
        %378 = vmatprep.subr.bf16.mxu0 0
        %379 = vmatpush1.bf16.msra.mxu0 0
        %380 = vmatprep.subr.bf16.mxu0 0
        %381 = vmatpush1.bf16.msra.mxu0 0
        %382 = vmatprep.subr.bf16.mxu0 0
        %383 = vmatpush1.bf16.msra.mxu0 0
        %384 = vmatprep.subr.bf16.mxu0 0
        %385 = vmatpush1.bf16.msra.mxu0 0
        %386 = vmatprep.subr.bf16.mxu0 0
        %387 = vmatpush1.bf16.msra.mxu0 0
        %388 = vmatprep.subr.bf16.mxu0 0
        %389 = vmatpush1.bf16.msra.mxu0 0
        %390 = vmatprep.subr.bf16.mxu0 0
        %391 = vmatpush1.bf16.msra.mxu0 0
        %392 = vmatprep.subr.bf16.mxu0 0
        %393 = vmatpush1.bf16.msra.mxu0 0
        %394 = vmatprep.subr.bf16.mxu0 0
        %395 = vmatpush1.bf16.msra.mxu0 0
        %396 = vmatprep.subr.bf16.mxu0 0
        %397 = vmatpush1.bf16.msra.mxu0 0
        %398 = vmatprep.subr.bf16.mxu0 0
        %399 = vmatpush1.bf16.msra.mxu0 0
        %400 = vmatprep.subr.bf16.mxu0 0
        %401 = vmatpush1.bf16.msra.mxu0 0
        %402 = vmatprep.mubr.bf16.mxu0 0
        %403 = vmatmul.mubr.bf16.gmra.mrb[0].mxu0 %v318
        %v404 = vpop.f32.mrb[0].mxu0
        %v405 = vadd.f32 %v295, %v404
        %v406 = vpop.f32.mrb[0].mxu0
        %v407 = vpop.f32.mrb[0].mxu0
        %v408 = vpop.f32.mrb[0].mxu0
        %409 = vdwg.mxu0
        %v410 = vld [vmem:[%s168] sm:$0xff]
        %s411 = scalar_lea.vmem %s1, 8
        %v412 = vld [vmem:[%s411] sm:$0xf]
        %v414 = vcombine.high %v410, %v410
        %v416 = vunpack.c.l.s4 1983009808
        %v417 = vunpack.c.0.s8 %v416
        %v418 = vlaneseq
        %v419 = vshrl.u32 %v418, 7
        %v420 = vsub.s32 %v417, %v419
        %v421 = vrot.slane %v410, %v420
        %v423 = vunpack.c.l.s4 1983009808
        %v424 = vunpack.c.0.s8 %v423
        %v425 = vlaneseq
        %v426 = vshrl.u32 %v425, 7
        %v427 = vsub.s32 %v424, %v426
        %v428 = vrot.slane %v414, %v427
        %v429 = vcombine.high %v421, %v421
        %v430 = vcombine.high %v428, %v428
        %431 = vrot.lane.b32.xlu0 %v421, 126
        %v432 = vpop.permute.xlu0 %431
        %433 = vrot.lane.b32.xlu0 %v429, 126
        %v434 = vpop.permute.xlu0 %433
        %435 = vrot.lane.b32.xlu0 %v428, 126
        %v436 = vpop.permute.xlu0 %435
        %437 = vrot.lane.b32.xlu0 %v430, 126
        %v438 = vpop.permute.xlu0 %437
        %vm439 = vcmask 1031168
        %v440 = vsel %vm439, %v432, %v434
        %v441 = vsel %vm439, %v434, %v436
        %v442 = vsel %vm439, %v436, %v438
        %v444 = vsel %vm205, %v412, 0
        %v447 = vsel %vm209, %v440, 0
        %v450 = vsel %vm209, %v441, 0
        %v453 = vsel %vm209, %v442, 0
        %455 = vmatprep.subr.bf16.mxu0 %v450
        %456 = vmatpush1.bf16.msra.mxu0 %v447
        %457 = vmatprep.subr.bf16.mxu0 0
        %458 = vmatpush1.bf16.msra.mxu0 0
        %459 = vmatprep.subr.bf16.mxu0 0
        %460 = vmatpush1.bf16.msra.mxu0 0
        %461 = vmatprep.subr.bf16.mxu0 0
        %462 = vmatpush1.bf16.msra.mxu0 0
        %463 = vmatprep.subr.bf16.mxu0 0
        %464 = vmatpush1.bf16.msra.mxu0 0
        %465 = vmatprep.subr.bf16.mxu0 0
        %466 = vmatpush1.bf16.msra.mxu0 0
        %467 = vmatprep.subr.bf16.mxu0 0
        %468 = vmatpush1.bf16.msra.mxu0 0
        %469 = vmatprep.subr.bf16.mxu0 0
        %470 = vmatpush1.bf16.msra.mxu0 0
        %471 = vmatprep.subr.bf16.mxu0 0
        %472 = vmatpush1.bf16.msra.mxu0 0
        %473 = vmatprep.subr.bf16.mxu0 0
        %474 = vmatpush1.bf16.msra.mxu0 0
        %475 = vmatprep.subr.bf16.mxu0 0
        %476 = vmatpush1.bf16.msra.mxu0 0
        %477 = vmatprep.subr.bf16.mxu0 0
        %478 = vmatpush1.bf16.msra.mxu0 0
        %479 = vmatprep.subr.bf16.mxu0 0
        %480 = vmatpush1.bf16.msra.mxu0 0
        %481 = vmatprep.subr.bf16.mxu0 0
        %482 = vmatpush1.bf16.msra.mxu0 0
        %483 = vmatprep.subr.bf16.mxu0 0
        %484 = vmatpush1.bf16.msra.mxu0 0
        %485 = vmatprep.subr.bf16.mxu0 0
        %486 = vmatpush1.bf16.msra.mxu0 0
        %487 = vmatprep.mubr.bf16.mxu0 0
        %488 = vmatmul.mubr.bf16.gmra.mrb[0].mxu0 %v444
        %v489 = vpop.f32.mrb[0].mxu0
        %v490 = vadd.f32 0.0, %v489
        %v491 = vpop.f32.mrb[0].mxu0
        %v492 = vadd.f32 0.0, %v491
        %v493 = vpop.f32.mrb[0].mxu0
        %v494 = vpop.f32.mrb[0].mxu0
        %495 = vdwg.mxu0
        %496 = vmatprep.subr.bf16.mxu0 0
        %497 = vmatpush1.bf16.msra.mxu0 %v453
        %498 = vmatprep.subr.bf16.mxu0 0
        %499 = vmatpush1.bf16.msra.mxu0 0
        %500 = vmatprep.subr.bf16.mxu0 0
        %501 = vmatpush1.bf16.msra.mxu0 0
        %502 = vmatprep.subr.bf16.mxu0 0
        %503 = vmatpush1.bf16.msra.mxu0 0
        %504 = vmatprep.subr.bf16.mxu0 0
        %505 = vmatpush1.bf16.msra.mxu0 0
        %506 = vmatprep.subr.bf16.mxu0 0
        %507 = vmatpush1.bf16.msra.mxu0 0
        %508 = vmatprep.subr.bf16.mxu0 0
        %509 = vmatpush1.bf16.msra.mxu0 0
        %510 = vmatprep.subr.bf16.mxu0 0
        %511 = vmatpush1.bf16.msra.mxu0 0
        %512 = vmatprep.subr.bf16.mxu0 0
        %513 = vmatpush1.bf16.msra.mxu0 0
        %514 = vmatprep.subr.bf16.mxu0 0
        %515 = vmatpush1.bf16.msra.mxu0 0
        %516 = vmatprep.subr.bf16.mxu0 0
        %517 = vmatpush1.bf16.msra.mxu0 0
        %518 = vmatprep.subr.bf16.mxu0 0
        %519 = vmatpush1.bf16.msra.mxu0 0
        %520 = vmatprep.subr.bf16.mxu0 0
        %521 = vmatpush1.bf16.msra.mxu0 0
        %522 = vmatprep.subr.bf16.mxu0 0
        %523 = vmatpush1.bf16.msra.mxu0 0
        %524 = vmatprep.subr.bf16.mxu0 0
        %525 = vmatpush1.bf16.msra.mxu0 0
        %526 = vmatprep.subr.bf16.mxu0 0
        %527 = vmatpush1.bf16.msra.mxu0 0
        %528 = vmatprep.mubr.bf16.mxu0 0
        %529 = vmatmul.mubr.bf16.gmra.mrb[0].mxu0 %v444
        %v530 = vpop.f32.mrb[0].mxu0
        %v531 = vadd.f32 0.0, %v530
        %v532 = vpop.f32.mrb[0].mxu0
        %v533 = vpop.f32.mrb[0].mxu0
        %v534 = vpop.f32.mrb[0].mxu0
        %535 = vdwg.mxu0
        %v536 = vadd.f32 %v364, %v490
        %v537 = vadd.f32 %v366, %v492
        %v538 = vadd.f32 %v405, %v531
        %v539 = vld [vmem:[%s168] sm:$0xff]
        %s540 = scalar_lea.vmem %s1, 12
        %v541 = vld [vmem:[%s540] sm:$0xf]
        %v543 = vcombine.high %v539, %v539
        %v545 = vunpack.c.l.s4 1983009808
        %v546 = vunpack.c.0.s8 %v545
        %v547 = vlaneseq
        %v548 = vshrl.u32 %v547, 7
        %v549 = vsub.s32 %v546, %v548
        %v550 = vrot.slane %v539, %v549
        %v552 = vunpack.c.l.s4 1983009808
        %v553 = vunpack.c.0.s8 %v552
        %v554 = vlaneseq
        %v555 = vshrl.u32 %v554, 7
        %v556 = vsub.s32 %v553, %v555
        %v557 = vrot.slane %v543, %v556
        %v558 = vcombine.high %v550, %v550
        %v559 = vcombine.high %v557, %v557
        %560 = vrot.lane.b32.xlu0 %v550, 110
        %v561 = vpop.permute.xlu0 %560
        %562 = vrot.lane.b32.xlu0 %v558, 110
        %v563 = vpop.permute.xlu0 %562
        %564 = vrot.lane.b32.xlu0 %v557, 110
        %v565 = vpop.permute.xlu0 %564
        %566 = vrot.lane.b32.xlu0 %v559, 110
        %v567 = vpop.permute.xlu0 %566
        %vm568 = vcmask 900096
        %v569 = vsel %vm568, %v561, %v563
        %v570 = vsel %vm568, %v563, %v565
        %v571 = vsel %vm568, %v565, %v567
        %v573 = vsel %vm205, %v541, 0
        %v576 = vsel %vm209, %v569, 0
        %v579 = vsel %vm209, %v570, 0
        %v582 = vsel %vm209, %v571, 0
        %584 = vmatprep.subr.bf16.mxu0 %v579
        %585 = vmatpush1.bf16.msra.mxu0 %v576
        %586 = vmatprep.subr.bf16.mxu0 0
        %587 = vmatpush1.bf16.msra.mxu0 0
        %588 = vmatprep.subr.bf16.mxu0 0
        %589 = vmatpush1.bf16.msra.mxu0 0
        %590 = vmatprep.subr.bf16.mxu0 0
        %591 = vmatpush1.bf16.msra.mxu0 0
        %592 = vmatprep.subr.bf16.mxu0 0
        %593 = vmatpush1.bf16.msra.mxu0 0
        %594 = vmatprep.subr.bf16.mxu0 0
        %595 = vmatpush1.bf16.msra.mxu0 0
        %596 = vmatprep.subr.bf16.mxu0 0
        %597 = vmatpush1.bf16.msra.mxu0 0
        %598 = vmatprep.subr.bf16.mxu0 0
        %599 = vmatpush1.bf16.msra.mxu0 0
        %600 = vmatprep.subr.bf16.mxu0 0
        %601 = vmatpush1.bf16.msra.mxu0 0
        %602 = vmatprep.subr.bf16.mxu0 0
        %603 = vmatpush1.bf16.msra.mxu0 0
        %604 = vmatprep.subr.bf16.mxu0 0
        %605 = vmatpush1.bf16.msra.mxu0 0
        %606 = vmatprep.subr.bf16.mxu0 0
        %607 = vmatpush1.bf16.msra.mxu0 0
        %608 = vmatprep.subr.bf16.mxu0 0
        %609 = vmatpush1.bf16.msra.mxu0 0
        %610 = vmatprep.subr.bf16.mxu0 0
        %611 = vmatpush1.bf16.msra.mxu0 0
        %612 = vmatprep.subr.bf16.mxu0 0
        %613 = vmatpush1.bf16.msra.mxu0 0
        %614 = vmatprep.subr.bf16.mxu0 0
        %615 = vmatpush1.bf16.msra.mxu0 0
        %616 = vmatprep.mubr.bf16.mxu0 0
        %617 = vmatmul.mubr.bf16.gmra.mrb[0].mxu0 %v573
        %v618 = vpop.f32.mrb[0].mxu0
        %v619 = vadd.f32 0.0, %v618
        %v620 = vpop.f32.mrb[0].mxu0
        %v621 = vadd.f32 0.0, %v620
        %v622 = vpop.f32.mrb[0].mxu0
        %v623 = vpop.f32.mrb[0].mxu0
        %624 = vdwg.mxu0
        %625 = vmatprep.subr.bf16.mxu0 0
        %626 = vmatpush1.bf16.msra.mxu0 %v582
        %627 = vmatprep.subr.bf16.mxu0 0
        %628 = vmatpush1.bf16.msra.mxu0 0
        %629 = vmatprep.subr.bf16.mxu0 0
        %630 = vmatpush1.bf16.msra.mxu0 0
        %631 = vmatprep.subr.bf16.mxu0 0
        %632 = vmatpush1.bf16.msra.mxu0 0
        %633 = vmatprep.subr.bf16.mxu0 0
        %634 = vmatpush1.bf16.msra.mxu0 0
        %635 = vmatprep.subr.bf16.mxu0 0
        %636 = vmatpush1.bf16.msra.mxu0 0
        %637 = vmatprep.subr.bf16.mxu0 0
        %638 = vmatpush1.bf16.msra.mxu0 0
        %639 = vmatprep.subr.bf16.mxu0 0
        %640 = vmatpush1.bf16.msra.mxu0 0
        %641 = vmatprep.subr.bf16.mxu0 0
        %642 = vmatpush1.bf16.msra.mxu0 0
        %643 = vmatprep.subr.bf16.mxu0 0
        %644 = vmatpush1.bf16.msra.mxu0 0
        %645 = vmatprep.subr.bf16.mxu0 0
        %646 = vmatpush1.bf16.msra.mxu0 0
        %647 = vmatprep.subr.bf16.mxu0 0
        %648 = vmatpush1.bf16.msra.mxu0 0
        %649 = vmatprep.subr.bf16.mxu0 0
        %650 = vmatpush1.bf16.msra.mxu0 0
        %651 = vmatprep.subr.bf16.mxu0 0
        %652 = vmatpush1.bf16.msra.mxu0 0
        %653 = vmatprep.subr.bf16.mxu0 0
        %654 = vmatpush1.bf16.msra.mxu0 0
        %655 = vmatprep.subr.bf16.mxu0 0
        %656 = vmatpush1.bf16.msra.mxu0 0
        %657 = vmatprep.mubr.bf16.mxu0 0
        %658 = vmatmul.mubr.bf16.gmra.mrb[0].mxu0 %v573
        %v659 = vpop.f32.mrb[0].mxu0
        %v660 = vadd.f32 0.0, %v659
        %v661 = vpop.f32.mrb[0].mxu0
        %v662 = vpop.f32.mrb[0].mxu0
        %v663 = vpop.f32.mrb[0].mxu0
        %664 = vdwg.mxu0
        %v665 = vadd.f32 %v536, %v619
        %v666 = vadd.f32 %v537, %v621
        %v667 = vadd.f32 %v538, %v660
        %v668 = vld [vmem:[%s168] sm:$0xff]
        %s669 = scalar_lea.vmem %s1, 16
        %v670 = vld [vmem:[%s669] sm:$0xf]
        %v672 = vcombine.high %v668, %v668
        %v674 = vunpack.c.l.s4 1983009808
        %v675 = vunpack.c.0.s8 %v674
        %v676 = vlaneseq
        %v677 = vshrl.u32 %v676, 7
        %v678 = vsub.s32 %v675, %v677
        %v679 = vrot.slane %v668, %v678
        %v681 = vunpack.c.l.s4 1983009808
        %v682 = vunpack.c.0.s8 %v681
        %v683 = vlaneseq
        %v684 = vshrl.u32 %v683, 7
        %v685 = vsub.s32 %v682, %v684
        %v686 = vrot.slane %v672, %v685
        %v687 = vcombine.high %v679, %v679
        %v688 = vcombine.high %v686, %v686
        %689 = vrot.lane.b32.xlu0 %v679, 109
        %v690 = vpop.permute.xlu0 %689
        %691 = vrot.lane.b32.xlu0 %v687, 109
        %v692 = vpop.permute.xlu0 %691
        %693 = vrot.lane.b32.xlu0 %v686, 109
        %v694 = vpop.permute.xlu0 %693
        %695 = vrot.lane.b32.xlu0 %v688, 109
        %v696 = vpop.permute.xlu0 %695
        %vm697 = vcmask 891904
        %v698 = vsel %vm697, %v690, %v692
        %v699 = vsel %vm697, %v692, %v694
        %v700 = vsel %vm697, %v694, %v696
        %v702 = vsel %vm205, %v670, 0
        %v705 = vsel %vm209, %v698, 0
        %v708 = vsel %vm209, %v699, 0
        %v711 = vsel %vm209, %v700, 0
        %713 = vmatprep.subr.bf16.mxu0 %v708
        %714 = vmatpush1.bf16.msra.mxu0 %v705
        %715 = vmatprep.subr.bf16.mxu0 0
        %716 = vmatpush1.bf16.msra.mxu0 0
        %717 = vmatprep.subr.bf16.mxu0 0
        %718 = vmatpush1.bf16.msra.mxu0 0
        %719 = vmatprep.subr.bf16.mxu0 0
        %720 = vmatpush1.bf16.msra.mxu0 0
        %721 = vmatprep.subr.bf16.mxu0 0
        %722 = vmatpush1.bf16.msra.mxu0 0
        %723 = vmatprep.subr.bf16.mxu0 0
        %724 = vmatpush1.bf16.msra.mxu0 0
        %725 = vmatprep.subr.bf16.mxu0 0
        %726 = vmatpush1.bf16.msra.mxu0 0
        %727 = vmatprep.subr.bf16.mxu0 0
        %728 = vmatpush1.bf16.msra.mxu0 0
        %729 = vmatprep.subr.bf16.mxu0 0
        %730 = vmatpush1.bf16.msra.mxu0 0
        %731 = vmatprep.subr.bf16.mxu0 0
        %732 = vmatpush1.bf16.msra.mxu0 0
        %733 = vmatprep.subr.bf16.mxu0 0
        %734 = vmatpush1.bf16.msra.mxu0 0
        %735 = vmatprep.subr.bf16.mxu0 0
        %736 = vmatpush1.bf16.msra.mxu0 0
        %737 = vmatprep.subr.bf16.mxu0 0
        %738 = vmatpush1.bf16.msra.mxu0 0
        %739 = vmatprep.subr.bf16.mxu0 0
        %740 = vmatpush1.bf16.msra.mxu0 0
        %741 = vmatprep.subr.bf16.mxu0 0
        %742 = vmatpush1.bf16.msra.mxu0 0
        %743 = vmatprep.subr.bf16.mxu0 0
        %744 = vmatpush1.bf16.msra.mxu0 0
        %745 = vmatprep.mubr.bf16.mxu0 0
        %746 = vmatmul.mubr.bf16.gmra.mrb[0].mxu0 %v702
        %v747 = vpop.f32.mrb[0].mxu0
        %v748 = vadd.f32 0.0, %v747
        %v749 = vpop.f32.mrb[0].mxu0
        %v750 = vadd.f32 0.0, %v749
        %v751 = vpop.f32.mrb[0].mxu0
        %v752 = vpop.f32.mrb[0].mxu0
        %753 = vdwg.mxu0
        %754 = vmatprep.subr.bf16.mxu0 0
        %755 = vmatpush1.bf16.msra.mxu0 %v711
        %756 = vmatprep.subr.bf16.mxu0 0
        %757 = vmatpush1.bf16.msra.mxu0 0
        %758 = vmatprep.subr.bf16.mxu0 0
        %759 = vmatpush1.bf16.msra.mxu0 0
        %760 = vmatprep.subr.bf16.mxu0 0
        %761 = vmatpush1.bf16.msra.mxu0 0
        %762 = vmatprep.subr.bf16.mxu0 0
        %763 = vmatpush1.bf16.msra.mxu0 0
        %764 = vmatprep.subr.bf16.mxu0 0
        %765 = vmatpush1.bf16.msra.mxu0 0
        %766 = vmatprep.subr.bf16.mxu0 0
        %767 = vmatpush1.bf16.msra.mxu0 0
        %768 = vmatprep.subr.bf16.mxu0 0
        %769 = vmatpush1.bf16.msra.mxu0 0
        %770 = vmatprep.subr.bf16.mxu0 0
        %771 = vmatpush1.bf16.msra.mxu0 0
        %772 = vmatprep.subr.bf16.mxu0 0
        %773 = vmatpush1.bf16.msra.mxu0 0
        %774 = vmatprep.subr.bf16.mxu0 0
        %775 = vmatpush1.bf16.msra.mxu0 0
        %776 = vmatprep.subr.bf16.mxu0 0
        %777 = vmatpush1.bf16.msra.mxu0 0
        %778 = vmatprep.subr.bf16.mxu0 0
        %779 = vmatpush1.bf16.msra.mxu0 0
        %780 = vmatprep.subr.bf16.mxu0 0
        %781 = vmatpush1.bf16.msra.mxu0 0
        %782 = vmatprep.subr.bf16.mxu0 0
        %783 = vmatpush1.bf16.msra.mxu0 0
        %784 = vmatprep.subr.bf16.mxu0 0
        %785 = vmatpush1.bf16.msra.mxu0 0
        %786 = vmatprep.mubr.bf16.mxu0 0
        %787 = vmatmul.mubr.bf16.gmra.mrb[0].mxu0 %v702
        %v788 = vpop.f32.mrb[0].mxu0
        %v789 = vadd.f32 0.0, %v788
        %v790 = vpop.f32.mrb[0].mxu0
        %v791 = vpop.f32.mrb[0].mxu0
        %v792 = vpop.f32.mrb[0].mxu0
        %793 = vdwg.mxu0
        %v794 = vadd.f32 %v665, %v748
        %v795 = vadd.f32 %v666, %v750
        %v796 = vadd.f32 %v667, %v789
        %v797 = vld [vmem:[%s168] sm:$0xff]
        %s798 = scalar_lea.vmem %s1, 20
        %v799 = vld [vmem:[%s798] sm:$0xf]
        %v801 = vcombine.high %v797, %v797
        %v803 = vunpack.c.l.s4 1983009808
        %v804 = vunpack.c.0.s8 %v803
        %v805 = vlaneseq
        %v806 = vshrl.u32 %v805, 7
        %v807 = vsub.s32 %v804, %v806
        %v808 = vrot.slane %v797, %v807
        %v810 = vunpack.c.l.s4 1983009808
        %v811 = vunpack.c.0.s8 %v810
        %v812 = vlaneseq
        %v813 = vshrl.u32 %v812, 7
        %v814 = vsub.s32 %v811, %v813
        %v815 = vrot.slane %v801, %v814
        %v816 = vcombine.high %v808, %v808
        %v817 = vcombine.high %v815, %v815
        %818 = vrot.lane.b32.xlu0 %v808, 108
        %v819 = vpop.permute.xlu0 %818
        %820 = vrot.lane.b32.xlu0 %v816, 108
        %v821 = vpop.permute.xlu0 %820
        %822 = vrot.lane.b32.xlu0 %v815, 108
        %v823 = vpop.permute.xlu0 %822
        %824 = vrot.lane.b32.xlu0 %v817, 108
        %v825 = vpop.permute.xlu0 %824
        %vm826 = vcmask 883712
        %v827 = vsel %vm826, %v819, %v821
        %v828 = vsel %vm826, %v821, %v823
        %v829 = vsel %vm826, %v823, %v825
        %v831 = vsel %vm205, %v799, 0
        %v834 = vsel %vm209, %v827, 0
        %v837 = vsel %vm209, %v828, 0
        %v840 = vsel %vm209, %v829, 0
        %842 = vmatprep.subr.bf16.mxu0 %v837
        %843 = vmatpush1.bf16.msra.mxu0 %v834
        %844 = vmatprep.subr.bf16.mxu0 0
        %845 = vmatpush1.bf16.msra.mxu0 0
        %846 = vmatprep.subr.bf16.mxu0 0
        %847 = vmatpush1.bf16.msra.mxu0 0
        %848 = vmatprep.subr.bf16.mxu0 0
        %849 = vmatpush1.bf16.msra.mxu0 0
        %850 = vmatprep.subr.bf16.mxu0 0
        %851 = vmatpush1.bf16.msra.mxu0 0
        %852 = vmatprep.subr.bf16.mxu0 0
        %853 = vmatpush1.bf16.msra.mxu0 0
        %854 = vmatprep.subr.bf16.mxu0 0
        %855 = vmatpush1.bf16.msra.mxu0 0
        %856 = vmatprep.subr.bf16.mxu0 0
        %857 = vmatpush1.bf16.msra.mxu0 0
        %858 = vmatprep.subr.bf16.mxu0 0
        %859 = vmatpush1.bf16.msra.mxu0 0
        %860 = vmatprep.subr.bf16.mxu0 0
        %861 = vmatpush1.bf16.msra.mxu0 0
        %862 = vmatprep.subr.bf16.mxu0 0
        %863 = vmatpush1.bf16.msra.mxu0 0
        %864 = vmatprep.subr.bf16.mxu0 0
        %865 = vmatpush1.bf16.msra.mxu0 0
        %866 = vmatprep.subr.bf16.mxu0 0
        %867 = vmatpush1.bf16.msra.mxu0 0
        %868 = vmatprep.subr.bf16.mxu0 0
        %869 = vmatpush1.bf16.msra.mxu0 0
        %870 = vmatprep.subr.bf16.mxu0 0
        %871 = vmatpush1.bf16.msra.mxu0 0
        %872 = vmatprep.subr.bf16.mxu0 0
        %873 = vmatpush1.bf16.msra.mxu0 0
        %874 = vmatprep.mubr.bf16.mxu0 0
        %875 = vmatmul.mubr.bf16.gmra.mrb[0].mxu0 %v831
        %v876 = vpop.f32.mrb[0].mxu0
        %v877 = vadd.f32 0.0, %v876
        %v878 = vpop.f32.mrb[0].mxu0
        %v879 = vadd.f32 0.0, %v878
        %v880 = vpop.f32.mrb[0].mxu0
        %v881 = vpop.f32.mrb[0].mxu0
        %882 = vdwg.mxu0
        %883 = vmatprep.subr.bf16.mxu0 0
        %884 = vmatpush1.bf16.msra.mxu0 %v840
        %885 = vmatprep.subr.bf16.mxu0 0
        %886 = vmatpush1.bf16.msra.mxu0 0
        %887 = vmatprep.subr.bf16.mxu0 0
        %888 = vmatpush1.bf16.msra.mxu0 0
        %889 = vmatprep.subr.bf16.mxu0 0
        %890 = vmatpush1.bf16.msra.mxu0 0
        %891 = vmatprep.subr.bf16.mxu0 0
        %892 = vmatpush1.bf16.msra.mxu0 0
        %893 = vmatprep.subr.bf16.mxu0 0
        %894 = vmatpush1.bf16.msra.mxu0 0
        %895 = vmatprep.subr.bf16.mxu0 0
        %896 = vmatpush1.bf16.msra.mxu0 0
        %897 = vmatprep.subr.bf16.mxu0 0
        %898 = vmatpush1.bf16.msra.mxu0 0
        %899 = vmatprep.subr.bf16.mxu0 0
        %900 = vmatpush1.bf16.msra.mxu0 0
        %901 = vmatprep.subr.bf16.mxu0 0
        %902 = vmatpush1.bf16.msra.mxu0 0
        %903 = vmatprep.subr.bf16.mxu0 0
        %904 = vmatpush1.bf16.msra.mxu0 0
        %905 = vmatprep.subr.bf16.mxu0 0
        %906 = vmatpush1.bf16.msra.mxu0 0
        %907 = vmatprep.subr.bf16.mxu0 0
        %908 = vmatpush1.bf16.msra.mxu0 0
        %909 = vmatprep.subr.bf16.mxu0 0
        %910 = vmatpush1.bf16.msra.mxu0 0
        %911 = vmatprep.subr.bf16.mxu0 0
        %912 = vmatpush1.bf16.msra.mxu0 0
        %913 = vmatprep.subr.bf16.mxu0 0
        %914 = vmatpush1.bf16.msra.mxu0 0
        %915 = vmatprep.mubr.bf16.mxu0 0
        %916 = vmatmul.mubr.bf16.gmra.mrb[0].mxu0 %v831
        %v917 = vpop.f32.mrb[0].mxu0
        %v918 = vadd.f32 0.0, %v917
        %v919 = vpop.f32.mrb[0].mxu0
        %v920 = vpop.f32.mrb[0].mxu0
        %v921 = vpop.f32.mrb[0].mxu0
        %922 = vdwg.mxu0
        %v923 = vadd.f32 %v794, %v877
        %v924 = vadd.f32 %v795, %v879
        %v925 = vadd.f32 %v796, %v918
        %v926 = vld [vmem:[%s168] sm:$0xff]
        %s927 = scalar_lea.vmem %s1, 24
        %v928 = vld [vmem:[%s927] sm:$0xf]
        %v930 = vcombine.high %v926, %v926
        %v932 = vunpack.c.l.s4 1983009808
        %v933 = vunpack.c.0.s8 %v932
        %v934 = vlaneseq
        %v935 = vshrl.u32 %v934, 7
        %v936 = vsub.s32 %v933, %v935
        %v937 = vrot.slane %v926, %v936
        %v939 = vunpack.c.l.s4 1983009808
        %v940 = vunpack.c.0.s8 %v939
        %v941 = vlaneseq
        %v942 = vshrl.u32 %v941, 7
        %v943 = vsub.s32 %v940, %v942
        %v944 = vrot.slane %v930, %v943
        %v945 = vcombine.high %v937, %v937
        %v946 = vcombine.high %v944, %v944
        %947 = vrot.lane.b32.xlu0 %v937, 92
        %v948 = vpop.permute.xlu0 %947
        %949 = vrot.lane.b32.xlu0 %v945, 92
        %v950 = vpop.permute.xlu0 %949
        %951 = vrot.lane.b32.xlu0 %v944, 92
        %v952 = vpop.permute.xlu0 %951
        %953 = vrot.lane.b32.xlu0 %v946, 92
        %v954 = vpop.permute.xlu0 %953
        %vm955 = vcmask 752640
        %v956 = vsel %vm955, %v948, %v950
        %v957 = vsel %vm955, %v950, %v952
        %v958 = vsel %vm955, %v952, %v954
        %v960 = vsel %vm205, %v928, 0
        %v963 = vsel %vm209, %v956, 0
        %v966 = vsel %vm209, %v957, 0
        %v969 = vsel %vm209, %v958, 0
        %971 = vmatprep.subr.bf16.mxu0 %v966
        %972 = vmatpush1.bf16.msra.mxu0 %v963
        %973 = vmatprep.subr.bf16.mxu0 0
        %974 = vmatpush1.bf16.msra.mxu0 0
        %975 = vmatprep.subr.bf16.mxu0 0
        %976 = vmatpush1.bf16.msra.mxu0 0
        %977 = vmatprep.subr.bf16.mxu0 0
        %978 = vmatpush1.bf16.msra.mxu0 0
        %979 = vmatprep.subr.bf16.mxu0 0
        %980 = vmatpush1.bf16.msra.mxu0 0
        %981 = vmatprep.subr.bf16.mxu0 0
        %982 = vmatpush1.bf16.msra.mxu0 0
        %983 = vmatprep.subr.bf16.mxu0 0
        %984 = vmatpush1.bf16.msra.mxu0 0
        %985 = vmatprep.subr.bf16.mxu0 0
        %986 = vmatpush1.bf16.msra.mxu0 0
        %987 = vmatprep.subr.bf16.mxu0 0
        %988 = vmatpush1.bf16.msra.mxu0 0
        %989 = vmatprep.subr.bf16.mxu0 0
        %990 = vmatpush1.bf16.msra.mxu0 0
        %991 = vmatprep.subr.bf16.mxu0 0
        %992 = vmatpush1.bf16.msra.mxu0 0
        %993 = vmatprep.subr.bf16.mxu0 0
        %994 = vmatpush1.bf16.msra.mxu0 0
        %995 = vmatprep.subr.bf16.mxu0 0
        %996 = vmatpush1.bf16.msra.mxu0 0
        %997 = vmatprep.subr.bf16.mxu0 0
        %998 = vmatpush1.bf16.msra.mxu0 0
        %999 = vmatprep.subr.bf16.mxu0 0
        %1000 = vmatpush1.bf16.msra.mxu0 0
        %1001 = vmatprep.subr.bf16.mxu0 0
        %1002 = vmatpush1.bf16.msra.mxu0 0
        %1003 = vmatprep.mubr.bf16.mxu0 0
        %1004 = vmatmul.mubr.bf16.gmra.mrb[0].mxu0 %v960
        %v1005 = vpop.f32.mrb[0].mxu0
        %v1006 = vadd.f32 0.0, %v1005
        %v1007 = vpop.f32.mrb[0].mxu0
        %v1008 = vadd.f32 0.0, %v1007
        %v1009 = vpop.f32.mrb[0].mxu0
        %v1010 = vpop.f32.mrb[0].mxu0
        %1011 = vdwg.mxu0
        %1012 = vmatprep.subr.bf16.mxu0 0
        %1013 = vmatpush1.bf16.msra.mxu0 %v969
        %1014 = vmatprep.subr.bf16.mxu0 0
        %1015 = vmatpush1.bf16.msra.mxu0 0
        %1016 = vmatprep.subr.bf16.mxu0 0
        %1017 = vmatpush1.bf16.msra.mxu0 0
        %1018 = vmatprep.subr.bf16.mxu0 0
        %1019 = vmatpush1.bf16.msra.mxu0 0
        %1020 = vmatprep.subr.bf16.mxu0 0
        %1021 = vmatpush1.bf16.msra.mxu0 0
        %1022 = vmatprep.subr.bf16.mxu0 0
        %1023 = vmatpush1.bf16.msra.mxu0 0
        %1024 = vmatprep.subr.bf16.mxu0 0
        %1025 = vmatpush1.bf16.msra.mxu0 0
        %1026 = vmatprep.subr.bf16.mxu0 0
        %1027 = vmatpush1.bf16.msra.mxu0 0
        %1028 = vmatprep.subr.bf16.mxu0 0
        %1029 = vmatpush1.bf16.msra.mxu0 0
        %1030 = vmatprep.subr.bf16.mxu0 0
        %1031 = vmatpush1.bf16.msra.mxu0 0
        %1032 = vmatprep.subr.bf16.mxu0 0
        %1033 = vmatpush1.bf16.msra.mxu0 0
        %1034 = vmatprep.subr.bf16.mxu0 0
        %1035 = vmatpush1.bf16.msra.mxu0 0
        %1036 = vmatprep.subr.bf16.mxu0 0
        %1037 = vmatpush1.bf16.msra.mxu0 0
        %1038 = vmatprep.subr.bf16.mxu0 0
        %1039 = vmatpush1.bf16.msra.mxu0 0
        %1040 = vmatprep.subr.bf16.mxu0 0
        %1041 = vmatpush1.bf16.msra.mxu0 0
        %1042 = vmatprep.subr.bf16.mxu0 0
        %1043 = vmatpush1.bf16.msra.mxu0 0
        %1044 = vmatprep.mubr.bf16.mxu0 0
        %1045 = vmatmul.mubr.bf16.gmra.mrb[0].mxu0 %v960
        %v1046 = vpop.f32.mrb[0].mxu0
        %v1047 = vadd.f32 0.0, %v1046
        %v1048 = vpop.f32.mrb[0].mxu0
        %v1049 = vpop.f32.mrb[0].mxu0
        %v1050 = vpop.f32.mrb[0].mxu0
        %1051 = vdwg.mxu0
        %v1052 = vadd.f32 %v923, %v1006
        %v1053 = vadd.f32 %v924, %v1008
        %v1054 = vadd.f32 %v925, %v1047
        %v1055 = vld [vmem:[%s168] sm:$0xff]
        %s1056 = scalar_lea.vmem %s1, 28
        %v1057 = vld [vmem:[%s1056] sm:$0xf]
        %v1059 = vcombine.high %v1055, %v1055
        %v1061 = vunpack.c.l.s4 1983009808
        %v1062 = vunpack.c.0.s8 %v1061
        %v1063 = vlaneseq
        %v1064 = vshrl.u32 %v1063, 7
        %v1065 = vsub.s32 %v1062, %v1064
        %v1066 = vrot.slane %v1055, %v1065
        %v1068 = vunpack.c.l.s4 1983009808
        %v1069 = vunpack.c.0.s8 %v1068
        %v1070 = vlaneseq
        %v1071 = vshrl.u32 %v1070, 7
        %v1072 = vsub.s32 %v1069, %v1071
        %v1073 = vrot.slane %v1059, %v1072
        %v1074 = vcombine.high %v1066, %v1066
        %v1075 = vcombine.high %v1073, %v1073
        %1076 = vrot.lane.b32.xlu0 %v1066, 91
        %v1077 = vpop.permute.xlu0 %1076
        %1078 = vrot.lane.b32.xlu0 %v1074, 91
        %v1079 = vpop.permute.xlu0 %1078
        %1080 = vrot.lane.b32.xlu0 %v1073, 91
        %v1081 = vpop.permute.xlu0 %1080
        %1082 = vrot.lane.b32.xlu0 %v1075, 91
        %v1083 = vpop.permute.xlu0 %1082
        %vm1084 = vcmask 744448
        %v1085 = vsel %vm1084, %v1077, %v1079
        %v1086 = vsel %vm1084, %v1079, %v1081
        %v1087 = vsel %vm1084, %v1081, %v1083
        %v1089 = vsel %vm205, %v1057, 0
        %v1092 = vsel %vm209, %v1085, 0
        %v1095 = vsel %vm209, %v1086, 0
        %v1098 = vsel %vm209, %v1087, 0
        %1100 = vmatprep.subr.bf16.mxu0 %v1095
        %1101 = vmatpush1.bf16.msra.mxu0 %v1092
        %1102 = vmatprep.subr.bf16.mxu0 0
        %1103 = vmatpush1.bf16.msra.mxu0 0
        %1104 = vmatprep.subr.bf16.mxu0 0
        %1105 = vmatpush1.bf16.msra.mxu0 0
        %1106 = vmatprep.subr.bf16.mxu0 0
        %1107 = vmatpush1.bf16.msra.mxu0 0
        %1108 = vmatprep.subr.bf16.mxu0 0
        %1109 = vmatpush1.bf16.msra.mxu0 0
        %1110 = vmatprep.subr.bf16.mxu0 0
        %1111 = vmatpush1.bf16.msra.mxu0 0
        %1112 = vmatprep.subr.bf16.mxu0 0
        %1113 = vmatpush1.bf16.msra.mxu0 0
        %1114 = vmatprep.subr.bf16.mxu0 0
        %1115 = vmatpush1.bf16.msra.mxu0 0
        %1116 = vmatprep.subr.bf16.mxu0 0
        %1117 = vmatpush1.bf16.msra.mxu0 0
        %1118 = vmatprep.subr.bf16.mxu0 0
        %1119 = vmatpush1.bf16.msra.mxu0 0
        %1120 = vmatprep.subr.bf16.mxu0 0
        %1121 = vmatpush1.bf16.msra.mxu0 0
        %1122 = vmatprep.subr.bf16.mxu0 0
        %1123 = vmatpush1.bf16.msra.mxu0 0
        %1124 = vmatprep.subr.bf16.mxu0 0
        %1125 = vmatpush1.bf16.msra.mxu0 0
        %1126 = vmatprep.subr.bf16.mxu0 0
        %1127 = vmatpush1.bf16.msra.mxu0 0
        %1128 = vmatprep.subr.bf16.mxu0 0
        %1129 = vmatpush1.bf16.msra.mxu0 0
        %1130 = vmatprep.subr.bf16.mxu0 0
        %1131 = vmatpush1.bf16.msra.mxu0 0
        %1132 = vmatprep.mubr.bf16.mxu0 0
        %1133 = vmatmul.mubr.bf16.gmra.mrb[0].mxu0 %v1089
        %v1134 = vpop.f32.mrb[0].mxu0
        %v1135 = vadd.f32 0.0, %v1134
        %v1136 = vpop.f32.mrb[0].mxu0
        %v1137 = vadd.f32 0.0, %v1136
        %v1138 = vpop.f32.mrb[0].mxu0
        %v1139 = vpop.f32.mrb[0].mxu0
        %1140 = vdwg.mxu0
        %1141 = vmatprep.subr.bf16.mxu0 0
        %1142 = vmatpush1.bf16.msra.mxu0 %v1098
        %1143 = vmatprep.subr.bf16.mxu0 0
        %1144 = vmatpush1.bf16.msra.mxu0 0
        %1145 = vmatprep.subr.bf16.mxu0 0
        %1146 = vmatpush1.bf16.msra.mxu0 0
        %1147 = vmatprep.subr.bf16.mxu0 0
        %1148 = vmatpush1.bf16.msra.mxu0 0
        %1149 = vmatprep.subr.bf16.mxu0 0
        %1150 = vmatpush1.bf16.msra.mxu0 0
        %1151 = vmatprep.subr.bf16.mxu0 0
        %1152 = vmatpush1.bf16.msra.mxu0 0
        %1153 = vmatprep.subr.bf16.mxu0 0
        %1154 = vmatpush1.bf16.msra.mxu0 0
        %1155 = vmatprep.subr.bf16.mxu0 0
        %1156 = vmatpush1.bf16.msra.mxu0 0
        %1157 = vmatprep.subr.bf16.mxu0 0
        %1158 = vmatpush1.bf16.msra.mxu0 0
        %1159 = vmatprep.subr.bf16.mxu0 0
        %1160 = vmatpush1.bf16.msra.mxu0 0
        %1161 = vmatprep.subr.bf16.mxu0 0
        %1162 = vmatpush1.bf16.msra.mxu0 0
        %1163 = vmatprep.subr.bf16.mxu0 0
        %1164 = vmatpush1.bf16.msra.mxu0 0
        %1165 = vmatprep.subr.bf16.mxu0 0
        %1166 = vmatpush1.bf16.msra.mxu0 0
        %1167 = vmatprep.subr.bf16.mxu0 0
        %1168 = vmatpush1.bf16.msra.mxu0 0
        %1169 = vmatprep.subr.bf16.mxu0 0
        %1170 = vmatpush1.bf16.msra.mxu0 0
        %1171 = vmatprep.subr.bf16.mxu0 0
        %1172 = vmatpush1.bf16.msra.mxu0 0
        %1173 = vmatprep.mubr.bf16.mxu0 0
        %1174 = vmatmul.mubr.bf16.gmra.mrb[0].mxu0 %v1089
        %v1175 = vpop.f32.mrb[0].mxu0
        %v1176 = vadd.f32 0.0, %v1175
        %v1177 = vpop.f32.mrb[0].mxu0
        %v1178 = vpop.f32.mrb[0].mxu0
        %v1179 = vpop.f32.mrb[0].mxu0
        %1180 = vdwg.mxu0
        %v1181 = vadd.f32 %v1052, %v1135
        %v1182 = vadd.f32 %v1053, %v1137
        %v1183 = vadd.f32 %v1054, %v1176
        %v1184 = vld [vmem:[%s168] sm:$0xff]
        %s1185 = scalar_lea.vmem %s1, 32
        %v1186 = vld [vmem:[%s1185] sm:$0xf]
        %v1188 = vcombine.high %v1184, %v1184
        %v1190 = vunpack.c.l.s4 1983009808
        %v1191 = vunpack.c.0.s8 %v1190
        %v1192 = vlaneseq
        %v1193 = vshrl.u32 %v1192, 7
        %v1194 = vsub.s32 %v1191, %v1193
        %v1195 = vrot.slane %v1184, %v1194
        %v1197 = vunpack.c.l.s4 1983009808
        %v1198 = vunpack.c.0.s8 %v1197
        %v1199 = vlaneseq
        %v1200 = vshrl.u32 %v1199, 7
        %v1201 = vsub.s32 %v1198, %v1200
        %v1202 = vrot.slane %v1188, %v1201
        %v1203 = vcombine.high %v1195, %v1195
        %v1204 = vcombine.high %v1202, %v1202
        %1205 = vrot.lane.b32.xlu0 %v1195, 90
        %v1206 = vpop.permute.xlu0 %1205
        %1207 = vrot.lane.b32.xlu0 %v1203, 90
        %v1208 = vpop.permute.xlu0 %1207
        %1209 = vrot.lane.b32.xlu0 %v1202, 90
        %v1210 = vpop.permute.xlu0 %1209
        %1211 = vrot.lane.b32.xlu0 %v1204, 90
        %v1212 = vpop.permute.xlu0 %1211
        %vm1213 = vcmask 736256
        %v1214 = vsel %vm1213, %v1206, %v1208
        %v1215 = vsel %vm1213, %v1208, %v1210
        %v1216 = vsel %vm1213, %v1210, %v1212
        %v1218 = vsel %vm205, %v1186, 0
        %v1221 = vsel %vm209, %v1214, 0
        %v1224 = vsel %vm209, %v1215, 0
        %v1227 = vsel %vm209, %v1216, 0
        %1229 = vmatprep.subr.bf16.mxu0 %v1224
        %1230 = vmatpush1.bf16.msra.mxu0 %v1221
        %1231 = vmatprep.subr.bf16.mxu0 0
        %1232 = vmatpush1.bf16.msra.mxu0 0
        %1233 = vmatprep.subr.bf16.mxu0 0
        %1234 = vmatpush1.bf16.msra.mxu0 0
        %1235 = vmatprep.subr.bf16.mxu0 0
        %1236 = vmatpush1.bf16.msra.mxu0 0
        %1237 = vmatprep.subr.bf16.mxu0 0
        %1238 = vmatpush1.bf16.msra.mxu0 0
        %1239 = vmatprep.subr.bf16.mxu0 0
        %1240 = vmatpush1.bf16.msra.mxu0 0
        %1241 = vmatprep.subr.bf16.mxu0 0
        %1242 = vmatpush1.bf16.msra.mxu0 0
        %1243 = vmatprep.subr.bf16.mxu0 0
        %1244 = vmatpush1.bf16.msra.mxu0 0
        %1245 = vmatprep.subr.bf16.mxu0 0
        %1246 = vmatpush1.bf16.msra.mxu0 0
        %1247 = vmatprep.subr.bf16.mxu0 0
        %1248 = vmatpush1.bf16.msra.mxu0 0
        %1249 = vmatprep.subr.bf16.mxu0 0
        %1250 = vmatpush1.bf16.msra.mxu0 0
        %1251 = vmatprep.subr.bf16.mxu0 0
        %1252 = vmatpush1.bf16.msra.mxu0 0
        %1253 = vmatprep.subr.bf16.mxu0 0
        %1254 = vmatpush1.bf16.msra.mxu0 0
        %1255 = vmatprep.subr.bf16.mxu0 0
        %1256 = vmatpush1.bf16.msra.mxu0 0
        %1257 = vmatprep.subr.bf16.mxu0 0
        %1258 = vmatpush1.bf16.msra.mxu0 0
        %1259 = vmatprep.subr.bf16.mxu0 0
        %1260 = vmatpush1.bf16.msra.mxu0 0
        %1261 = vmatprep.mubr.bf16.mxu0 0
        %1262 = vmatmul.mubr.bf16.gmra.mrb[0].mxu0 %v1218
        %v1263 = vpop.f32.mrb[0].mxu0
        %v1264 = vadd.f32 0.0, %v1263
        %v1265 = vpop.f32.mrb[0].mxu0
        %v1266 = vadd.f32 0.0, %v1265
        %v1267 = vpop.f32.mrb[0].mxu0
        %v1268 = vpop.f32.mrb[0].mxu0
        %1269 = vdwg.mxu0
        %1270 = vmatprep.subr.bf16.mxu0 0
        %1271 = vmatpush1.bf16.msra.mxu0 %v1227
        %1272 = vmatprep.subr.bf16.mxu0 0
        %1273 = vmatpush1.bf16.msra.mxu0 0
        %1274 = vmatprep.subr.bf16.mxu0 0
        %1275 = vmatpush1.bf16.msra.mxu0 0
        %1276 = vmatprep.subr.bf16.mxu0 0
        %1277 = vmatpush1.bf16.msra.mxu0 0
        %1278 = vmatprep.subr.bf16.mxu0 0
        %1279 = vmatpush1.bf16.msra.mxu0 0
        %1280 = vmatprep.subr.bf16.mxu0 0
        %1281 = vmatpush1.bf16.msra.mxu0 0
        %1282 = vmatprep.subr.bf16.mxu0 0
        %1283 = vmatpush1.bf16.msra.mxu0 0
        %1284 = vmatprep.subr.bf16.mxu0 0
        %1285 = vmatpush1.bf16.msra.mxu0 0
        %1286 = vmatprep.subr.bf16.mxu0 0
        %1287 = vmatpush1.bf16.msra.mxu0 0
        %1288 = vmatprep.subr.bf16.mxu0 0
        %1289 = vmatpush1.bf16.msra.mxu0 0
        %1290 = vmatprep.subr.bf16.mxu0 0
        %1291 = vmatpush1.bf16.msra.mxu0 0
        %1292 = vmatprep.subr.bf16.mxu0 0
        %1293 = vmatpush1.bf16.msra.mxu0 0
        %1294 = vmatprep.subr.bf16.mxu0 0
        %1295 = vmatpush1.bf16.msra.mxu0 0
        %1296 = vmatprep.subr.bf16.mxu0 0
        %1297 = vmatpush1.bf16.msra.mxu0 0
        %1298 = vmatprep.subr.bf16.mxu0 0
        %1299 = vmatpush1.bf16.msra.mxu0 0
        %1300 = vmatprep.subr.bf16.mxu0 0
        %1301 = vmatpush1.bf16.msra.mxu0 0
        %1302 = vmatprep.mubr.bf16.mxu0 0
        %1303 = vmatmul.mubr.bf16.gmra.mrb[0].mxu0 %v1218
        %v1304 = vpop.f32.mrb[0].mxu0
        %v1305 = vadd.f32 0.0, %v1304
        %v1306 = vpop.f32.mrb[0].mxu0
        %v1307 = vpop.f32.mrb[0].mxu0
        %v1308 = vpop.f32.mrb[0].mxu0
        %1309 = vdwg.mxu0
        %v1310 = vadd.f32 %v1181, %v1264
        %v1311 = vadd.f32 %v1182, %v1266
        %v1312 = vadd.f32 %v1183, %v1305
        %v1313 = vld [vmem:[%s2] sm:$0xff]
        %1315 = vset.pattern.permute.xlu0 0
        %1316 = vperm.xlu0 %1315, %v1313
        %v1317 = vpop.permute.xlu0 %1316
        %v1319 = vadd.f32 %v1310, %v1317
        %v1320 = vadd.f32 %v1311, %v1317
        %v1321 = vadd.f32 %v1312, %v1317
        %v1322 = vmax.f32 %v1319, 0.0
        %v1323 = vmax.f32 %v1320, 0.0
        %v1324 = vmax.f32 %v1321, 0.0
        %1325 = vst [vmem:[%s163] sm:$0xff] %v1322
        %1326 = vst [vmem:[%s163 + $0x8] sm:$0xff] %v1323
        %1327 = vst [vmem:[%s163 + $0x10] sm:$0xff] %v1324
        %s1328 = sand.u32 %s93, 1
        %s1329 = scalar_lea.sflag [#allocation3], %s1328
        %s1330 = sand.u32 %s93, 1
        %s1331 = smul.addr %s1330, 24
        %s1332 = scalar_lea.vmem [#allocation2], %s1331
        // Predicated region
        $region33: #{tpu_custom_call.1} parent=31 // pred_check
          %p1333 = pneg %p103
        $region34: #{tpu_custom_call.1} parent=31 // pred_check_branch
          %1335 = sbr.rel (%p1333) target = $region36
        $region35: #{tpu_custom_call.1} parent=31 // pred_region
          %s1337 = ssub.s32 384, 384
          %1338 = vsyncadd %s1329, %s1337
          %s1339 = smul.addr %s17, 3
          %s1340 = smul.addr %s1339, 128
          %s1341 = scalar_lea.hbm %s3, %s1340
          %s1343 = sshll.u32 %s1332, 4
          %s1344 = int_to_ptr.vmem [resolvable:$true] %s1343
          %1346 = dma.vmem_to_hbm [thread:$0]  %s1344, 384, %s1341, %s1329
        $region36: #{tpu_custom_call.1} parent=31 // pred_fallthru
          _
      $region32: #{tpu_custom_call.1} parent=5 // pred_fallthru
        _
      %p1347 = scmp.le.s32.totalorder 2, %s12
      // Predicated region
      $region37: #{tpu_custom_call.1} parent=5 // pred_check
        %p1348 = pneg %p1347
      $region38: #{tpu_custom_call.1} parent=5 // pred_check_branch
        %1350 = sbr.rel (%p1348) target = $region40
      $region39: #{tpu_custom_call.1} parent=5 // pred_region
        %s1351 = ssub.s32 %s12, 2
        // Predicated region
        $region41: #{tpu_custom_call.1} parent=39 // pred_check
          %p1352 = pneg %p109
        $region42: #{tpu_custom_call.1} parent=39 // pred_check_branch
          %1354 = sbr.rel (%p1352) target = $region44
        $region43: #{tpu_custom_call.1} parent=39 // pred_region
          %s1355 = sand.u32 %s94, 1
          %s1356 = scalar_lea.sflag [#allocation3], %s1355
          %s1357 = sand.u32 %s94, 1
          %s1358 = smul.addr %s1357, 24
          %s1359 = scalar_lea.vmem [#allocation2], %s1358
          %1360 = dma.done %s1356, 384
        $region44: #{tpu_custom_call.1} parent=39 // pred_fallthru
          _
      $region40: #{tpu_custom_call.1} parent=5 // pred_fallthru
        _
    $region6: #{tpu_custom_call.1} parent=1 // loop_footer
      %s16 = sadd.s32 1, %s12
    $region7: #{tpu_custom_call.1} parent=1 // loop_footer_branch
      %11 = sbr.rel target = $region3
    $region8: #{tpu_custom_call.1} parent=1 // loop_exit
      _
    %1361 = vsyncpa [#allocation3], 1
    %s1362 = scalar_lea.sflag [#allocation3], 1
    %1363 = vsyncpa %s1362, 1

</llo_original>
